<compile_context>
chip_gen: v5e
topology: v5e:2x2
jax: 0.10.0
libtpu: 0.0.40
codegen_flags: <defaults>
</compile_context>

<pallas_src>
import functools

import jax
import jax.numpy as jnp
from jax import lax
from jax.experimental import pallas as pl
from jax.experimental.pallas import tpu as pltpu

EPS = 1e-5
BATCH = 2
H0 = 28            # input spatial size implied by fc1 = Linear(12*12*128, 1)
KS = 5
S = 896            # per-image canvas stride: 28*28 = 784 padded to 7*128 lanes
RC = BATCH * S     # canvas lane width (multiple of 128 -> unmasked stores)
# (cin, cout, valid output spatial size) of the four conv blocks
LAYER_CFG = ((1, 16, 24), (16, 32, 20), (32, 64, 16), (64, 128, 12))


# --------------------------- roll-convention probe -------------------------- #

def _roll_probe_kernel(amt_ref, x_ref, o_ref):
    o_ref[...] = pltpu.roll(x_ref[...], amt_ref[0], 1)


def _probe_roll_convention():
    """Detect on the real hardware whether pltpu.roll follows jnp.roll's
    convention (element i moves to i + shift).  The conv tap-shift formula in
    the main kernel is selected from this, so it is correct either way."""
    x = jnp.arange(128, dtype=jnp.float32).reshape(1, 128)
    amt = jnp.array([1], dtype=jnp.int32)
    out = pl.pallas_call(
        _roll_probe_kernel,
        out_shape=jax.ShapeDtypeStruct((1, 128), jnp.float32),
        grid=(1,),
        in_specs=[
            pl.BlockSpec(memory_space=pltpu.MemorySpace.SMEM),
            pl.BlockSpec((1, 128), lambda i: (0, 0)),
        ],
        out_specs=pl.BlockSpec((1, 128), lambda i: (0, 0)),
    )(amt, x)
    out = jax.block_until_ready(out)
    return bool(out[0, 0] == 127.0)


# ------------------------------ fused kernel -------------------------------- #

def _disc_kernel(x_ref, masks_ref,
                 w1_ref, g1_ref, b1_ref,
                 w2_ref, g2_ref, b2_ref,
                 w3_ref, g3_ref, b3_ref,
                 w4_ref, g4_ref, b4_ref,
                 wfc_ref, fcb_ref,
                 out_ref, act_ref, acc_ref, *, roll_like_jnp):
    """Whole Discriminator forward on (C, RC) lane-dense VMEM canvases."""

    # Stage the (1, RC) input canvas into the activation scratch (row 0).
    act_ref[pl.ds(0, 1), :] = x_ref[...]

    def conv_bn_relu(w_ref, g_ref, be_ref, lidx, cin, cout, oh):
        n_valid = float(BATCH * oh * oh)
        acc_ref[pl.ds(0, cout), :] = jnp.zeros((cout, RC), jnp.float32)

        def tap(t, carry):
            di = t // KS
            dj = t - di * KS
            s = di * H0 + dj                       # uniform lane shift of this tap
            amt = (RC - s) % RC if roll_like_jnp else s
            x = act_ref[pl.ds(0, cin), :]          # (cin, RC)
            # xs[:, p] == x[:, p + s] for every valid lane p (wrap-around only
            # lands on masked-out canvas positions and never feeds valid output).
            xs = pltpu.roll(x, amt, 1)
            w_t = w_ref[t]                         # (cout, cin)
            if cin == 1:
                contrib = w_t * xs                 # VPU outer product (layer-1 stencil)
            else:
                contrib = jnp.dot(w_t, xs, preferred_element_type=jnp.float32)
            acc_ref[pl.ds(0, cout), :] = acc_ref[pl.ds(0, cout), :] + contrib
            return carry

        lax.fori_loop(0, KS * KS, tap, 0)

        y = acc_ref[pl.ds(0, cout), :]             # (cout, RC)
        valid = masks_ref[lidx] > 0.5              # (1, RC) validity mask
        # One-pass BatchNorm statistics over the valid lanes only
        # (training mode: biased variance, eps=1e-5; conv bias cancels out).
        ym = jnp.where(valid, y, 0.0)
        s1 = jnp.sum(ym, axis=1, keepdims=True)            # (cout, 1)
        s2 = jnp.sum(ym * ym, axis=1, keepdims=True)       # (cout, 1)
        mean = s1 * (1.0 / n_valid)
        var = s2 * (1.0 / n_valid) - mean * mean
        scale = lax.rsqrt(var + EPS) * g_ref[...]          # (cout, 1)
        offs = be_ref[...] - mean * scale
        yact = jnp.maximum(y * scale + offs, 0.0)          # BN + ReLU
        act_ref[pl.ds(0, cout), :] = jnp.where(valid, yact, 0.0)

    conv_bn_relu(w1_ref, g1_ref, b1_ref, 0, 1, 16, 24)
    conv_bn_relu(w2_ref, g2_ref, b2_ref, 1, 16, 32, 20)
    conv_bn_relu(w3_ref, g3_ref, b3_ref, 2, 32, 64, 16)
    conv_bn_relu(w4_ref, g4_ref, b4_ref, 3, 64, 128, 12)

    # -------- Linear(12*12*128 -> 1) + sigmoid as a lane-dense VPU reduce ----
    wfc = wfc_ref[...]                                     # (128, S)
    lane = lax.broadcasted_iota(jnp.int32, (1, 128), 1)
    logits = jnp.zeros((1, 128), jnp.float32)
    for b in range(BATCH):                                 # static unroll (B=2)
        seg = act_ref[pl.ds(0, 128), pl.ds(b * S, S)]      # (128, S), 128-aligned
        r = jnp.sum(seg * wfc, axis=1, keepdims=True)      # (128, 1) lane reduce
        r = jnp.sum(r, axis=0, keepdims=True)              # (1, 1)
        logits = jnp.where(lane == b, r, logits)
    out_ref[...] = jax.nn.sigmoid(logits + fcb_ref[...])   # EUP exp/recip


def _full_spec(shape):
    n = len(shape)
    return pl.BlockSpec(shape, lambda i, n=n: (0,) * n)


def _make_pallas_forward(roll_like_jnp):
    in_shapes = [(1, RC), (len(LAYER_CFG), 1, RC)]
    for cin, cout, _ in LAYER_CFG:
        in_shapes += [(KS * KS, cout, cin), (cout, 1), (cout, 1)]
    in_shapes += [(128, S), (1, 1)]

    kern = functools.partial(_disc_kernel, roll_like_jnp=roll_like_jnp)
    return pl.pallas_call(
        kern,
        out_shape=jax.ShapeDtypeStruct((1, 128), jnp.float32),
        grid=(1,),
        in_specs=[_full_spec(s) for s in in_shapes],
        out_specs=_full_spec((1, 128)),
        scratch_shapes=[
            pltpu.VMEM((128, RC), jnp.float32),   # activation canvas (ping)
            pltpu.VMEM((128, RC), jnp.float32),   # conv accumulator
        ],
        compiler_params=pltpu.CompilerParams(
            dimension_semantics=("arbitrary",),
            vmem_limit_bytes=32 * 1024 * 1024,
        ),
    )


# ------------------------------- JAX wrapper --------------------------------- #

def make_forward(roll_like_jnp):
    pallas_fwd = _make_pallas_forward(roll_like_jnp)

    @jax.jit
    def forward(x, conv_params, fc_params):
        b = x.shape[0]
        assert b == BATCH
        # Input canvas: position (b, h, w) -> lane b*S + h*28 + w.
        xc = x.reshape(b, H0 * H0).astype(jnp.float32)
        xc = jnp.pad(xc, ((0, 0), (0, S - H0 * H0))).reshape(1, RC)

        # Per-layer validity masks on the fixed 28x28 canvas.
        masks = []
        for (_, _, oh) in LAYER_CFG:
            m = jnp.zeros((H0, H0), jnp.float32).at[:oh, :oh].set(1.0).reshape(-1)
            m = jnp.pad(m, (0, S - H0 * H0))
            masks.append(jnp.tile(m, b))
        masks = jnp.stack(masks).reshape(len(LAYER_CFG), 1, RC)

        args = [xc, masks]
        for (w, _bias, gamma, beta) in conv_params:
            cout, cin = w.shape[0], w.shape[1]
            # NOTE: the conv bias is intentionally dropped - a per-channel bias
            # added before training-mode BatchNorm is exactly cancelled by the
            # mean subtraction, so it never reaches the kernel.
            wt = w.transpose(2, 3, 0, 1).reshape(KS * KS, cout, cin).astype(jnp.float32)
            args += [wt,
                     gamma.reshape(cout, 1).astype(jnp.float32),
                     beta.reshape(cout, 1).astype(jnp.float32)]

        fcw, fcb = fc_params                       # (12*12*128, 1), (1,)
        oh4 = LAYER_CFG[-1][2]
        wfc = fcw.reshape(128, oh4, oh4).astype(jnp.float32)   # NCHW .view(B,-1) order
        wfc_canvas = jnp.zeros((128, H0, H0), jnp.float32).at[:, :oh4, :oh4].set(wfc)
        wfc_canvas = jnp.pad(wfc_canvas.reshape(128, H0 * H0),
                             ((0, 0), (0, S - H0 * H0)))       # (128, S)
        args += [wfc_canvas, fcb.reshape(1, 1).astype(jnp.float32)]

        out = pallas_fwd(*args)                    # (1, 128)
        return out[0, :b].reshape(b, 1)

    return forward


# ------------------------- params & pure-JAX reference ----------------------- #

def init_params(key):
    specs = [(16, 1), (32, 16), (64, 32), (128, 64)]
    conv_params = []
    for cout, cin in specs:
        key, k1, k2 = jax.random.split(key, 3)
        w = jax.random.normal(k1, (cout, cin, KS, KS), jnp.float32) * 0.05
        b = jax.random.normal(k2, (cout,), jnp.float32) * 0.05
        gamma = jnp.ones((cout,), jnp.float32)     # BatchNorm2d default init
        beta = jnp.zeros((cout,), jnp.float32)
        conv_params.append((w, b, gamma, beta))
    key, k1, k2 = jax.random.split(key, 3)
    fcw = jax.random.normal(k1, (12 * 12 * 128, 1), jnp.float32) * 0.01
    fcb = jax.random.normal(k2, (1,), jnp.float32) * 0.01
    return conv_params, (fcw, fcb)


def reference_forward(x, conv_params, fc_params):
    out = x
    for (w, b, gamma, beta) in conv_params:
        out = jax.lax.conv_general_dilated(
            out, w, (1, 1), 'VALID', dimension_numbers=('NCHW', 'OIHW', 'NCHW'))
        out = out + b.reshape(1, -1, 1, 1)
        mean = out.mean(axis=(0, 2, 3), keepdims=True)
        var = ((out - mean) ** 2).mean(axis=(0, 2, 3), keepdims=True)
        out = (out - mean) * jax.lax.rsqrt(var + EPS)
        out = out * gamma.reshape(1, -1, 1, 1) + beta.reshape(1, -1, 1, 1)
        out = jnp.maximum(out, 0.0)
    flat = out.reshape(out.shape[0], -1)
    fcw, fcb = fc_params
    return jax.nn.sigmoid(flat @ fcw + fcb)


if __name__ == "__main__":
    key = jax.random.PRNGKey(0)
    key, xkey = jax.random.split(key)
    # Input implied by the module: 1 channel, 28x28 (12 = 28 - 4*4 after four 5x5 valid convs).
    x = jax.random.normal(xkey, (BATCH, 1, H0, H0), jnp.float32)
    conv_params, fc_params = init_params(key)

    forward = make_forward(_probe_roll_convention())
    out = jax.block_until_ready(forward(x, conv_params, fc_params))

    ref = reference_forward(x, conv_params, fc_params)
    assert out.shape == (BATCH, 1)
    assert jnp.allclose(out, ref, rtol=1e-3, atol=1e-3), (out, ref)

    print("KERNEL_OK")
</pallas_src>

<mosaic_0001>
module attributes {stable_mosaic.version = 11 : i64} {
  func.func @_roll_probe_kernel(%arg0: i32, %arg1: memref<1xi32, #tpu.memory_space<smem>>, %arg2: memref<1x128xf32, #tpu.memory_space<vmem>>, %arg3: memref<1x128xf32, #tpu.memory_space<vmem>>) attributes {dimension_semantics = [#tpu.dimension_semantics<arbitrary>], iteration_bounds = array<i64: 1>, scalar_prefetch = 0 : i64, scratch_operands = 0 : i64, tpu.core_type = #tpu.core_type<tc>, window_params = [{transform_indices = @transform_0, window_bounds = array<i64: 1>}, {pipeline_mode = #tpu.pipeline_mode<synchronous>, transform_indices = @transform_1, window_bounds = array<i64: 1, 128>}, {pipeline_mode = #tpu.pipeline_mode<synchronous>, transform_indices = @transform_2, window_bounds = array<i64: 1, 128>}]} {
    %c0 = arith.constant 0 : index
    %c0_0 = arith.constant 0 : index
    %0 = vector.load %arg2[%c0, %c0_0] : memref<1x128xf32, #tpu.memory_space<vmem>>, vector<1x128xf32>
    %c0_1 = arith.constant 0 : index
    %1 = memref.load %arg1[%c0_1] : memref<1xi32, #tpu.memory_space<smem>>
    %2 = tpu.dynamic_rotate %0 by %1 dim 1 : vector<1x128xf32>, i32 -> vector<1x128xf32>
    %c0_2 = arith.constant 0 : index
    %c0_3 = arith.constant 0 : index
    %3 = vector.load %arg3[%c0_2, %c0_3] : memref<1x128xf32, #tpu.memory_space<vmem>>, vector<1x128xf32>
    tpu.vector_store %arg3[%c0_2, %c0_3], %2 {strides = array<i32>} : memref<1x128xf32, #tpu.memory_space<vmem>>, vector<1x128xf32>,
    return
  }
  func.func @transform_0(%arg0: i32) -> i32 {
    %c0_i32 = arith.constant 0 : i32
    %c0_i32_0 = arith.constant 0 : i32
    return %c0_i32 : i32
  }
  func.func @transform_1(%arg0: i32) -> (i32, i32) {
    %c0_i32 = arith.constant 0 : i32
    %c0_i32_0 = arith.constant 0 : i32
    %c0_i32_1 = arith.constant 0 : i32
    return %c0_i32, %c0_i32_0 : i32, i32
  }
  func.func @transform_2(%arg0: i32) -> (i32, i32) {
    %c0_i32 = arith.constant 0 : i32
    %c0_i32_0 = arith.constant 0 : i32
    %c0_i32_1 = arith.constant 0 : i32
    return %c0_i32, %c0_i32_0 : i32, i32
  }
}

</mosaic_0001>

<llo_original>
// kernel: tpu_custom_call.1
$region0: #{tpu_custom_call.1}
  #allocation0 [shape = 'u32[]', space=smem, size = 0x4, offset = 0x4, fixed_abs, tag = 'smem constant byte address 0x4 - core index']
  #allocation1 [shape = 'u32[72,128]{1,0:T(1,128)}', space=vmem, size = 0x9000, scoped, tag = 'internal scratch']
  #allocation2 [shape = 's32[1]{0:T(128)S(6)}', space=smem, size = 0x200, scoped, tag = 'scoped memory for tpu_custom_call.1']
  %s0 = inlined_call_operand.<no memory space> [shape: s32[1], index: 0, kind: input, shape index: {}]
  %s1 = inlined_call_operand.vmem [shape: f32[1,128], index: 1, kind: input, shape index: {}]
  %s2 = inlined_call_operand.hbm [shape: f32[1,128], index: 2, kind: output, shape index: {}]
  %s3 = sld [smem:[#allocation0]]
  $region18: #{tpu_custom_call.1} parent=0
    _
  %s5 = ssub.s32 1, %s3
  %s6 = scalar_select 0, %s5, %s3
  %7 = sst [smem:[#allocation2]] %s0
  $region1: #{tpu_custom_call.1} parent=0
    #allocation3 [shape = 'u8[512]{0}', space=vmem, size = 0x400, scoped, tag = 'output window, operand 0, single buffered']
    #allocation4 [shape = 's32[1]{0}', space=sflag, size = 0x4, scoped, tag = 'scoped memory for tpu_custom_call.1']
    %8 = vsyncpa [#allocation4], 0
    // Predicated region
    $region2: #{tpu_custom_call.1} parent=1 // pred_check
      _
    $region3: #{tpu_custom_call.1} parent=1 // pred_check_branch
      %10 = sbr.rel (0) target = $region5
    $region4: #{tpu_custom_call.1} parent=1 // pred_region
      _
    $region5: #{tpu_custom_call.1} parent=1 // pred_fallthru
      _
    // Predicated region
    $region6: #{tpu_custom_call.1} parent=1 // pred_check
      _
    $region7: #{tpu_custom_call.1} parent=1 // pred_check_branch
      %12 = sbr.rel (0) target = $region9
    $region8: #{tpu_custom_call.1} parent=1 // pred_region
      _
    $region9: #{tpu_custom_call.1} parent=1 // pred_fallthru
      _
    %v13 = vld [vmem:[%s1] sm:$0x1]
    %s14 = sld [smem:[#allocation2]]
    %s15 = sand.u32 %s14, 127
    %s16 = sand.u32 %s15, 127
    %17 = vrot.lane.b32.xlu0 %v13, %s16
    %v18 = vpop.permute.xlu0 %17
    %19 = vst [vmem:[#allocation3] sm:$0x1] %v18
    // Predicated region
    $region10: #{tpu_custom_call.1} parent=1 // pred_check
      _
    $region11: #{tpu_custom_call.1} parent=1 // pred_check_branch
      %21 = sbr.rel (0) target = $region13
    $region12: #{tpu_custom_call.1} parent=1 // pred_region
      %23 = vsyncadd [#allocation4], 0
      %s25 = sshll.u32 [#allocation3], 4
      %s26 = int_to_ptr.vmem [resolvable:$true] %s25
      %s27 = sshll.u32 %s2, 4
      %s28 = int_to_ptr.hbm [resolvable:$true] %s27
      %30 = dma.vmem_to_hbm [thread:$0]  %s26, 16, %s28, [#allocation4]
    $region13: #{tpu_custom_call.1} parent=1 // pred_fallthru
      _
    // Predicated region
    $region14: #{tpu_custom_call.1} parent=1 // pred_check
      _
    $region15: #{tpu_custom_call.1} parent=1 // pred_check_branch
      %32 = sbr.rel (0) target = $region17
    $region16: #{tpu_custom_call.1} parent=1 // pred_region
      %34 = dma.done [#allocation4], 16
    $region17: #{tpu_custom_call.1} parent=1 // pred_fallthru
      _
    %35 = vsyncpa [#allocation4], 1

</llo_original>
